<compile_context>
chip_gen: v5e
topology: v5e:2x2
jax: 0.10.0
libtpu: 0.0.40
codegen_flags: <defaults>
</compile_context>

<pallas_src>
import functools

import jax
import jax.numpy as jnp
from jax.experimental import pallas as pl
from jax.experimental.pallas import tpu as pltpu


ALPHA = 0.5


def _round_up(n, m):
    return ((n + m - 1) // m) * m


def _pick_t_tile(t, cap=1024):
    """Largest tile <= cap that divides T and is sublane-aligned (or T itself)."""
    if t <= cap:
        return t
    for cand in range(cap, 7, -1):
        if t % cand == 0 and cand % 8 == 0:
            return cand
    return t  # fallback: whole T resident


def aligner_loss_kernel(x_ref, y_ref, w_ref, wt_ref,        # inputs
                        sim_ref, nll_ref,                    # per-row outputs (resident over V)
                        m_sc, l_sc, xb_sc,                   # VMEM scratch
                        *, v_real):
    v = pl.program_id(1)                  # V-tile index (reduction, innermost)
    nv = pl.num_programs(1)

    # ---- per T-tile init: MSE rows, bf16 copy of x for the MXU, softmax state ----
    @pl.when(v == 0)
    def _init():
        x = x_ref[...]                                        # (Tt, D) f32
        d = x - y_ref[...]
        sim_ref[...] = jnp.sum(d * d, axis=-1, keepdims=True)  # per-row SSE (un-normalized)
        xb_sc[...] = x.astype(jnp.bfloat16)                   # cast once per T tile
        m_sc[...] = jnp.full(m_sc.shape, -jnp.inf, jnp.float32)
        l_sc[...] = jnp.zeros(l_sc.shape, jnp.float32)

    # ---- correctness (CrossEntropy): V-tiled online log-sum-exp ----
    # TODO(synk): whisper transcriber replaced by a deterministic linear projection.
    logits = jnp.dot(xb_sc[...], w_ref[...],
                     preferred_element_type=jnp.float32)      # (Tt, Vt) f32, MXU bf16 inputs
    Tt, Vt = logits.shape

    if v_real % Vt != 0:  # static: only emit tail masking if the vocab was padded
        col = jax.lax.broadcasted_iota(jnp.int32, (Tt, Vt), 1)
        logits = jnp.where(col < (v_real - v * Vt), logits, -jnp.inf)

    m_prev = m_sc[...]                                        # (Tt, 1)
    m_new = jnp.maximum(m_prev, jnp.max(logits, axis=-1, keepdims=True))
    l_sc[...] = (jnp.exp(m_prev - m_new) * l_sc[...]
                 + jnp.sum(jnp.exp(logits - m_new), axis=-1, keepdims=True))
    m_sc[...] = m_new

    # ---- finalize this T-tile after the last V tile ----
    @pl.when(v == nv - 1)
    def _fin():
        lse = m_sc[...] + jnp.log(l_sc[...])                  # (Tt, 1)
        # target logit: columns of W already gathered in the wrapper -> f32 row-reduce
        tgt = jnp.sum(x_ref[...] * wt_ref[...], axis=-1, keepdims=True)
        nll_ref[...] = lse - tgt                              # per-row NLL


def aligner_loss(output_audio, original_audio, w, targets, alpha=ALPHA,
                 t_tile=None, v_tile=None):
    B, L = output_audio.shape
    D, V = w.shape
    assert (B * L) % D == 0, "B*L must be a multiple of the feature dim D"
    T = (B * L) // D
    assert targets.shape == (T, 1)

    # Lane/sublane-dense frame view; one HBM stream feeds both the MSE and the matmul LHS.
    x_frames = output_audio.reshape(T, D)
    y_frames = original_audio.reshape(T, D)

    # Target-column gather hoisted out of the kernel (T*D*4 bytes, tiny vs W).
    w_tgt = jnp.take(w, targets[:, 0], axis=1).T.astype(jnp.float32)   # (T, D)

    # bf16 weights for the MXU; accumulation stays f32 in-kernel.
    w_bf16 = w.astype(jnp.bfloat16)

    # ---- tile selection ----
    if v_tile is None:
        v_tile = min(2048, _round_up(V, 128))
    assert v_tile % 128 == 0
    v_pad = _round_up(V, v_tile)
    if v_pad != V:
        w_bf16 = jnp.pad(w_bf16, ((0, 0), (0, v_pad - V)))   # padded cols masked in-kernel
    nv = v_pad // v_tile

    if t_tile is None:
        t_tile = _pick_t_tile(T, cap=1024)
    assert T % t_tile == 0 and (t_tile % 8 == 0 or t_tile == T)
    nt = T // t_tile

    kernel = functools.partial(aligner_loss_kernel, v_real=V)

    sim_rows, nll_rows = pl.pallas_call(
        kernel,
        out_shape=(jax.ShapeDtypeStruct((T, 1), jnp.float32),
                   jax.ShapeDtypeStruct((T, 1), jnp.float32)),
        grid_spec=pltpu.PrefetchScalarGridSpec(
            num_scalar_prefetch=0,
            grid=(nt, nv),                                    # V (reduction) innermost
            in_specs=[
                pl.BlockSpec((t_tile, D), lambda t, v: (t, 0)),    # output-audio frames (f32)
                pl.BlockSpec((t_tile, D), lambda t, v: (t, 0)),    # original-audio frames (f32)
                pl.BlockSpec((D, v_tile), lambda t, v: (0, v)),    # transcriber-head W (bf16)
                pl.BlockSpec((t_tile, D), lambda t, v: (t, 0)),    # gathered target cols (f32)
            ],
            out_specs=(
                pl.BlockSpec((t_tile, 1), lambda t, v: (t, 0)),    # per-row SSE partials
                pl.BlockSpec((t_tile, 1), lambda t, v: (t, 0)),    # per-row NLL
            ),
            scratch_shapes=[
                pltpu.VMEM((t_tile, 1), jnp.float32),              # running max m
                pltpu.VMEM((t_tile, 1), jnp.float32),              # running exp-sum l
                pltpu.VMEM((t_tile, D), jnp.bfloat16),             # bf16 copy of x for MXU
            ],
        ),
        compiler_params=pltpu.CompilerParams(
            dimension_semantics=("parallel", "arbitrary"),         # T sharded across TCs (v7x)
            vmem_limit_bytes=64 * 1024 * 1024,
        ),
    )(x_frames, y_frames, w_bf16, w_tgt)

    sim = jnp.sum(sim_rows) / (B * L)        # mean squared error
    corr = jnp.sum(nll_rows) / T             # mean NLL
    loss = alpha * sim + corr
    return {"loss": loss, "similarity_loss": sim, "correctness_loss": corr}


def _reference(output_audio, original_audio, w, targets, alpha=ALPHA):
    D = w.shape[0]
    T = output_audio.size // D
    feats = output_audio.reshape(T, D)
    sim = jnp.mean((output_audio - original_audio) ** 2)
    logits = feats @ w
    logp = jax.nn.log_softmax(logits, axis=-1)
    nll = -jnp.take_along_axis(logp, targets, axis=-1)
    corr = jnp.mean(nll)
    return alpha * sim + corr, sim, corr


if __name__ == "__main__":
    key = jax.random.PRNGKey(0)
    k1, k2, k3, k4 = jax.random.split(key, 4)

    B, L = 2, 2048          # small synthetic waveforms
    D = 256                 # contraction depth fills the 256-deep MXU on v6e/v7x
    V = 200                 # deliberately NOT a multiple of 128 -> exercises vocab-tail mask
    T = (B * L) // D        # 16 "token" frames

    output_audio = jax.random.normal(k1, (B, L), dtype=jnp.float32)
    original_audio = output_audio + 0.1 * jax.random.normal(k2, (B, L), dtype=jnp.float32)

    # Deterministic "transcriber head" weights (synthetic, not a checkpoint load).
    w = 0.02 * jax.random.normal(k3, (D, V), dtype=jnp.float32)

    # Translated-text token ids.
    targets = jax.random.randint(k4, (T, 1), 0, V, dtype=jnp.int32)

    # Small explicit tiles: (nt, nv) = (2, 2) grid exercises multi-tile T (blocked per-row
    # outputs), the online log-sum-exp over V, and the padded-vocab tail mask.
    losses = aligner_loss(output_audio, original_audio, w, targets, t_tile=8, v_tile=128)
    jax.block_until_ready(losses["loss"])

    # Default (auto) tile path: whole T resident, single padded V tile.
    losses_auto = aligner_loss(output_audio, original_audio, w, targets)
    jax.block_until_ready(losses_auto["loss"])

    ref_loss, ref_sim, ref_corr = _reference(output_audio, original_audio, w, targets)
    for l in (losses, losses_auto):
        # MSE path is pure f32 -> tight; CE path uses bf16 MXU operands -> loosened.
        assert jnp.allclose(l["similarity_loss"], ref_sim, rtol=1e-4, atol=1e-5)
        assert jnp.allclose(l["correctness_loss"], ref_corr, rtol=2e-2, atol=2e-2)
        assert jnp.allclose(l["loss"], ref_loss, rtol=2e-2, atol=2e-2)

    print("KERNEL_OK")
</pallas_src>

<mosaic_0001>
module attributes {stable_mosaic.version = 11 : i64} {
  func.func @aligner_loss_kernel(%arg0: i32, %arg1: i32, %arg2: memref<8x256xf32, #tpu.memory_space<vmem>>, %arg3: memref<8x256xf32, #tpu.memory_space<vmem>>, %arg4: memref<256x128xbf16, #tpu.memory_space<vmem>>, %arg5: memref<8x256xf32, #tpu.memory_space<vmem>>, %arg6: memref<8x1xf32, #tpu.memory_space<vmem>>, %arg7: memref<8x1xf32, #tpu.memory_space<vmem>>, %arg8: memref<8x1xf32, #tpu.memory_space<vmem>>, %arg9: memref<8x1xf32, #tpu.memory_space<vmem>>, %arg10: memref<8x256xbf16, #tpu.memory_space<vmem>>) attributes {dimension_semantics = [#tpu.dimension_semantics<parallel>, #tpu.dimension_semantics<arbitrary>], iteration_bounds = array<i64: 2, 2>, scalar_prefetch = 0 : i64, scratch_operands = 3 : i64, tpu.core_type = #tpu.core_type<tc>, window_params = [{transform_indices = @transform_0, window_bounds = array<i64: 8, 256>}, {transform_indices = @transform_1, window_bounds = array<i64: 8, 256>}, {transform_indices = @transform_2, window_bounds = array<i64: 256, 128>}, {transform_indices = @transform_3, window_bounds = array<i64: 8, 256>}, {transform_indices = @transform_4, window_bounds = array<i64: 8, 1>}, {transform_indices = @transform_5, window_bounds = array<i64: 8, 1>}]} {
    %c0_i32 = arith.constant 0 : i32
    %0 = arith.cmpi eq, %arg1, %c0_i32 : i32
    %1 = arith.extui %0 : i1 to i32
    %c0_i32_0 = arith.constant 0 : i32
    %2 = arith.cmpi ne, %1, %c0_i32_0 : i32
    scf.if %2 {
      %c0_16 = arith.constant 0 : index
      %c0_17 = arith.constant 0 : index
      %32 = vector.load %arg2[%c0_16, %c0_17] : memref<8x256xf32, #tpu.memory_space<vmem>>, vector<8x256xf32>
      %c0_18 = arith.constant 0 : index
      %c0_19 = arith.constant 0 : index
      %33 = vector.load %arg3[%c0_18, %c0_19] : memref<8x256xf32, #tpu.memory_space<vmem>>, vector<8x256xf32>
      %34 = arith.subf %32, %33 : vector<8x256xf32>
      %35 = arith.mulf %34, %34 : vector<8x256xf32>
      %cst_20 = arith.constant dense<0.000000e+00> : vector<8xf32>
      %36 = vector.multi_reduction <add>, %35, %cst_20 [1] : vector<8x256xf32> to vector<8xf32>
      %37 = vector.shape_cast %36 : vector<8xf32> to vector<8x1xf32>
      %c0_21 = arith.constant 0 : index
      %c0_22 = arith.constant 0 : index
      %38 = vector.load %arg6[%c0_21, %c0_22] : memref<8x1xf32, #tpu.memory_space<vmem>>, vector<8x1xf32>
      tpu.vector_store %arg6[%c0_21, %c0_22], %37 {strides = array<i32>} : memref<8x1xf32, #tpu.memory_space<vmem>>, vector<8x1xf32>,
      %39 = arith.truncf %32 : vector<8x256xf32> to vector<8x256xbf16>
      %c0_23 = arith.constant 0 : index
      %c0_24 = arith.constant 0 : index
      %40 = vector.load %arg10[%c0_23, %c0_24] : memref<8x256xbf16, #tpu.memory_space<vmem>>, vector<8x256xbf16>
      tpu.vector_store %arg10[%c0_23, %c0_24], %39 {strides = array<i32>} : memref<8x256xbf16, #tpu.memory_space<vmem>>, vector<8x256xbf16>,
      %cst_25 = arith.constant 0xFF800000 : f32
      %41 = vector.broadcast %cst_25 : f32 to vector<8x1xf32>
      %c0_26 = arith.constant 0 : index
      %c0_27 = arith.constant 0 : index
      %42 = vector.load %arg8[%c0_26, %c0_27] : memref<8x1xf32, #tpu.memory_space<vmem>>, vector<8x1xf32>
      tpu.vector_store %arg8[%c0_26, %c0_27], %41 {strides = array<i32>} : memref<8x1xf32, #tpu.memory_space<vmem>>, vector<8x1xf32>,
      %cst_28 = arith.constant 0.000000e+00 : f32
      %43 = vector.broadcast %cst_28 : f32 to vector<8x1xf32>
      %c0_29 = arith.constant 0 : index
      %c0_30 = arith.constant 0 : index
      %44 = vector.load %arg9[%c0_29, %c0_30] : memref<8x1xf32, #tpu.memory_space<vmem>>, vector<8x1xf32>
      tpu.vector_store %arg9[%c0_29, %c0_30], %43 {strides = array<i32>} : memref<8x1xf32, #tpu.memory_space<vmem>>, vector<8x1xf32>,
    } else {
    }
    %c0 = arith.constant 0 : index
    %c0_1 = arith.constant 0 : index
    %3 = vector.load %arg10[%c0, %c0_1] : memref<8x256xbf16, #tpu.memory_space<vmem>>, vector<8x256xbf16>
    %c0_2 = arith.constant 0 : index
    %c0_3 = arith.constant 0 : index
    %4 = vector.load %arg4[%c0_2, %c0_3] : memref<256x128xbf16, #tpu.memory_space<vmem>>, vector<256x128xbf16>
    %cst = arith.constant dense<0.000000e+00> : vector<8x128xf32>
    %5 = tpu.matmul %3, %4, %cst {dimension_numbers = #tpu.dot_dimension_numbers<[1], [0], [0], [1], [0, 0, 1, 1], [], []>} : vector<8x256xbf16>, vector<256x128xbf16>, vector<8x128xf32> -> vector<8x128xf32>
    %6 = tpu.iota {dimensions = array<i32: 1>} : vector<8x128xi32>
    %c128_i32 = arith.constant 128 : i32
    %7 = arith.muli %arg1, %c128_i32 : i32
    %c200_i32 = arith.constant 200 : i32
    %8 = arith.subi %c200_i32, %7 : i32
    %9 = vector.broadcast %8 : i32 to vector<8x128xi32>
    %10 = arith.cmpi slt, %6, %9 : vector<8x128xi32>
    %cst_4 = arith.constant 0xFF800000 : f32
    %11 = vector.broadcast %cst_4 : f32 to vector<8x128xf32>
    %12 = arith.select %10, %5, %11 : vector<8x128xi1>, vector<8x128xf32>
    %c0_5 = arith.constant 0 : index
    %c0_6 = arith.constant 0 : index
    %13 = vector.load %arg8[%c0_5, %c0_6] : memref<8x1xf32, #tpu.memory_space<vmem>>, vector<8x1xf32>
    %cst_7 = arith.constant dense<0xFF800000> : vector<8xf32>
    %14 = vector.multi_reduction <maximumf>, %12, %cst_7 [1] : vector<8x128xf32> to vector<8xf32>
    %15 = vector.shape_cast %14 : vector<8xf32> to vector<8x1xf32>
    %16 = arith.maximumf %13, %15 : vector<8x1xf32>
    %17 = arith.subf %13, %16 : vector<8x1xf32>
    %18 = math.exp %17 : vector<8x1xf32>
    %c0_8 = arith.constant 0 : index
    %c0_9 = arith.constant 0 : index
    %19 = vector.load %arg9[%c0_8, %c0_9] : memref<8x1xf32, #tpu.memory_space<vmem>>, vector<8x1xf32>
    %20 = arith.mulf %18, %19 : vector<8x1xf32>
    %21 = vector.broadcast %16 : vector<8x1xf32> to vector<8x128xf32>
    %22 = arith.subf %12, %21 : vector<8x128xf32>
    %23 = math.exp %22 : vector<8x128xf32>
    %cst_10 = arith.constant dense<0.000000e+00> : vector<8xf32>
    %24 = vector.multi_reduction <add>, %23, %cst_10 [1] : vector<8x128xf32> to vector<8xf32>
    %25 = vector.shape_cast %24 : vector<8xf32> to vector<8x1xf32>
    %26 = arith.addf %20, %25 : vector<8x1xf32>
    %c0_11 = arith.constant 0 : index
    %c0_12 = arith.constant 0 : index
    %27 = vector.load %arg9[%c0_11, %c0_12] : memref<8x1xf32, #tpu.memory_space<vmem>>, vector<8x1xf32>
    tpu.vector_store %arg9[%c0_11, %c0_12], %26 {strides = array<i32>} : memref<8x1xf32, #tpu.memory_space<vmem>>, vector<8x1xf32>,
    %c0_13 = arith.constant 0 : index
    %c0_14 = arith.constant 0 : index
    %28 = vector.load %arg8[%c0_13, %c0_14] : memref<8x1xf32, #tpu.memory_space<vmem>>, vector<8x1xf32>
    tpu.vector_store %arg8[%c0_13, %c0_14], %16 {strides = array<i32>} : memref<8x1xf32, #tpu.memory_space<vmem>>, vector<8x1xf32>,
    %c1_i32 = arith.constant 1 : i32
    %29 = arith.cmpi eq, %arg1, %c1_i32 : i32
    %30 = arith.extui %29 : i1 to i32
    %c0_i32_15 = arith.constant 0 : i32
    %31 = arith.cmpi ne, %30, %c0_i32_15 : i32
    scf.if %31 {
      %c0_16 = arith.constant 0 : index
      %c0_17 = arith.constant 0 : index
      %32 = vector.load %arg8[%c0_16, %c0_17] : memref<8x1xf32, #tpu.memory_space<vmem>>, vector<8x1xf32>
      %c0_18 = arith.constant 0 : index
      %c0_19 = arith.constant 0 : index
      %33 = vector.load %arg9[%c0_18, %c0_19] : memref<8x1xf32, #tpu.memory_space<vmem>>, vector<8x1xf32>
      %34 = math.log %33 : vector<8x1xf32>
      %35 = arith.addf %32, %34 : vector<8x1xf32>
      %c0_20 = arith.constant 0 : index
      %c0_21 = arith.constant 0 : index
      %36 = vector.load %arg2[%c0_20, %c0_21] : memref<8x256xf32, #tpu.memory_space<vmem>>, vector<8x256xf32>
      %c0_22 = arith.constant 0 : index
      %c0_23 = arith.constant 0 : index
      %37 = vector.load %arg5[%c0_22, %c0_23] : memref<8x256xf32, #tpu.memory_space<vmem>>, vector<8x256xf32>
      %38 = arith.mulf %36, %37 : vector<8x256xf32>
      %cst_24 = arith.constant dense<0.000000e+00> : vector<8xf32>
      %39 = vector.multi_reduction <add>, %38, %cst_24 [1] : vector<8x256xf32> to vector<8xf32>
      %40 = vector.shape_cast %39 : vector<8xf32> to vector<8x1xf32>
      %41 = arith.subf %35, %40 : vector<8x1xf32>
      %c0_25 = arith.constant 0 : index
      %c0_26 = arith.constant 0 : index
      %42 = vector.load %arg7[%c0_25, %c0_26] : memref<8x1xf32, #tpu.memory_space<vmem>>, vector<8x1xf32>
      tpu.vector_store %arg7[%c0_25, %c0_26], %41 {strides = array<i32>} : memref<8x1xf32, #tpu.memory_space<vmem>>, vector<8x1xf32>,
    } else {
    }
    return
  }
  func.func @transform_0(%arg0: i32, %arg1: i32) -> (i32, i32) {
    %c0_i32 = arith.constant 0 : i32
    %c0_i32_0 = arith.constant 0 : i32
    return %arg0, %c0_i32 : i32, i32
  }
  func.func @transform_1(%arg0: i32, %arg1: i32) -> (i32, i32) {
    %c0_i32 = arith.constant 0 : i32
    %c0_i32_0 = arith.constant 0 : i32
    return %arg0, %c0_i32 : i32, i32
  }
  func.func @transform_2(%arg0: i32, %arg1: i32) -> (i32, i32) {
    %c0_i32 = arith.constant 0 : i32
    %c0_i32_0 = arith.constant 0 : i32
    return %c0_i32, %arg1 : i32, i32
  }
  func.func @transform_3(%arg0: i32, %arg1: i32) -> (i32, i32) {
    %c0_i32 = arith.constant 0 : i32
    %c0_i32_0 = arith.constant 0 : i32
    return %arg0, %c0_i32 : i32, i32
  }
  func.func @transform_4(%arg0: i32, %arg1: i32) -> (i32, i32) {
    %c0_i32 = arith.constant 0 : i32
    %c0_i32_0 = arith.constant 0 : i32
    return %arg0, %c0_i32 : i32, i32
  }
  func.func @transform_5(%arg0: i32, %arg1: i32) -> (i32, i32) {
    %c0_i32 = arith.constant 0 : i32
    %c0_i32_0 = arith.constant 0 : i32
    return %arg0, %c0_i32 : i32, i32
  }
}

</mosaic_0001>

<llo_original>
// kernel: tpu_custom_call.1
$region0: #{tpu_custom_call.1}
  #allocation0 [shape = 'u32[]', space=smem, size = 0x4, offset = 0x4, fixed_abs, tag = 'smem constant byte address 0x4 - core index']
  #allocation1 [shape = 'u32[72,128]{1,0:T(1,128)}', space=vmem, size = 0x9000, scoped, tag = 'internal scratch']
  #allocation2 [shape = 'f32[8,1]{1,0:T(8,128)}', space=vmem, size = 0x1000, scoped, tag = 'scratch operand']
  #allocation3 [shape = 'f32[8,1]{1,0:T(8,128)}', space=vmem, size = 0x1000, scoped, tag = 'scratch operand']
  #allocation4 [shape = 'bf16[8,256]{1,0:T(8,128)(2,1)}', space=vmem, size = 0x1000, scoped, tag = 'scratch operand']
  %s0 = inlined_call_operand.hbm [shape: f32[16,256], index: 0, kind: input, shape index: {}]
  %s1 = inlined_call_operand.hbm [shape: f32[16,256], index: 1, kind: input, shape index: {}]
  %s2 = inlined_call_operand.hbm [shape: bf16[256,256], index: 2, kind: input, shape index: {}]
  %s3 = inlined_call_operand.hbm [shape: f32[16,256], index: 3, kind: input, shape index: {}]
  %s4 = inlined_call_operand.vmem [shape: f32[16,1], index: 4, kind: output, shape index: {0}]
  %s5 = inlined_call_operand.vmem [shape: f32[16,1], index: 5, kind: output, shape index: {1}]
  %6 = xla_tuple %s4, %s5
  %s7 = sld [smem:[#allocation0]]
  $region81: #{tpu_custom_call.1} parent=0
    _
  %s9 = ssub.s32 1, %s7
  %s10 = scalar_select 0, %s9, %s7
  $region1: #{tpu_custom_call.1} parent=0
    #allocation5 [shape = 'u8[16384]{0}', space=vmem, size = 0x4000, scoped, tag = 'input window, operand 0']
    #allocation6 [shape = 's32[2]{0}', space=sflag, size = 0x8, scoped, tag = 'scoped memory for tpu_custom_call.1']
    #allocation7 [shape = 'u8[16384]{0}', space=vmem, size = 0x4000, scoped, tag = 'input window, operand 1']
    #allocation8 [shape = 's32[2]{0}', space=sflag, size = 0x8, scoped, tag = 'scoped memory for tpu_custom_call.1']
    #allocation9 [shape = 'u8[131072]{0}', space=vmem, size = 0x20000, scoped, tag = 'input window, operand 2']
    #allocation10 [shape = 'u8[16384]{0}', space=vmem, size = 0x4000, scoped, tag = 'input window, operand 3']
    #allocation11 [shape = 's32[2]{0}', space=sflag, size = 0x8, scoped, tag = 'scoped memory for tpu_custom_call.1']
    %11 = vsyncpa [#allocation6], 0
    %s12 = scalar_lea.sflag [#allocation6], 1
    %13 = vsyncpa %s12, 0
    %14 = vsyncpa [#allocation8], 0
    %s15 = scalar_lea.sflag [#allocation8], 1
    %16 = vsyncpa %s15, 0
    %17 = vsyncpa [#allocation11], 0
    %s18 = scalar_lea.sflag [#allocation11], 1
    %19 = vsyncpa %s18, 0
    loop: start=0, step=1, limit=6
    $region2: #{tpu_custom_call.1} parent=1 // loop_pre_header
      _
    $region3: #{tpu_custom_call.1} parent=1 // loop_header
      %s21 = sphi 0, %s25
      %p22 = scmp.ge.s32.totalorder %s21, 6
      %s28 = sphi 0, %s40
      %s29 = sphi 0, %s36
      %s30 = sphi 0, %s28
      %s31 = sphi 0, %s29
      %s32 = sphi 0, %s30
      %s33 = sphi 0, %s31
      %s43 = sphi 0, %s45
      %s46 = sphi 0, %s43
      %s47 = sphi 0, %s46
      %s63 = sphi 0, %s47
      %s69 = sphi 0, %s71
      %s72 = sphi 0, %s69
      %s73 = sphi 0, %s72
      %s89 = sphi 0, %s73
      %s95 = sphi 0, %s97
      %s98 = sphi 0, %s95
      %s99 = sphi 0, %s98
      %s115 = sphi 0, %s99
      %s121 = sphi 0, %s123
      %s124 = sphi 0, %s121
      %s125 = sphi 0, %s124
      %s141 = sphi 0, %s125
      %s147 = sphi 0, %s149
      %s150 = sphi 0, %s147
      %s151 = sphi 0, %s150
      %s167 = sphi 0, %s151
      %s173 = sphi 0, %s175
      %s176 = sphi 0, %s173
      %s177 = sphi 0, %s176
      %s193 = sphi 0, %s177
    $region4: #{tpu_custom_call.1} parent=1 // loop_header_branch
      %24 = sbr.rel (%p22) target = $region8
    $region5: #{tpu_custom_call.1} parent=1 // loop_body
      %s26 = ssub.s32 %s21, 1
      %s27 = ssub.s32 %s21, 2
      %s34 = sadd.s32 1, %s29
      %p35 = scmp.ge.s32.totalorder %s34, 2
      %s36 = scalar_select %p35, 0, %s34
      %s37 = sadd.s32 1, %s28
      %s38 = scalar_select %p35, %s37, %s28
      %p39 = scmp.ge.s32.totalorder %s38, 2
      %s40 = scalar_select %p39, 0, %s38
      %s41 = ssub.s32 %s28, %s40
      %p42 = scmp.eq.s32.totalorder %s41, 0
      %s44 = sadd.s32 %s43, 1
      %s45 = scalar_select %p42, %s43, %s44
      %p48 = pneg %p42
      %p49 = scmp.eq.s32.totalorder %s21, 3
      %p50 = por %p48, %p49
      %p51 = scmp.ne.s32.totalorder %s43, %s46
      %p52 = scmp.eq.s32.totalorder %s21, 0
      %p53 = por %p51, %p52
      %p54 = scmp.ne.s32.totalorder %s43, %s46
      %p55 = scmp.eq.s32.totalorder %s26, 3
      %p56 = por %p54, %p55
      %p57 = scmp.ne.s32.totalorder %s46, %s47
      %p58 = scmp.eq.s32.totalorder %s26, 0
      %p59 = por %p57, %p58
      %p60 = scmp.ne.s32.totalorder %s46, %s47
      %p61 = scmp.eq.s32.totalorder %s27, 3
      %p62 = por %p60, %p61
      %p64 = scmp.ne.s32.totalorder %s47, %s63
      %p65 = scmp.eq.s32.totalorder %s27, 0
      %p66 = por %p64, %p65
      %s67 = ssub.s32 %s28, %s40
      %p68 = scmp.eq.s32.totalorder %s67, 0
      %s70 = sadd.s32 %s69, 1
      %s71 = scalar_select %p68, %s69, %s70
      %p74 = pneg %p68
      %p75 = scmp.eq.s32.totalorder %s21, 3
      %p76 = por %p74, %p75
      %p77 = scmp.ne.s32.totalorder %s69, %s72
      %p78 = scmp.eq.s32.totalorder %s21, 0
      %p79 = por %p77, %p78
      %p80 = scmp.ne.s32.totalorder %s69, %s72
      %p81 = scmp.eq.s32.totalorder %s26, 3
      %p82 = por %p80, %p81
      %p83 = scmp.ne.s32.totalorder %s72, %s73
      %p84 = scmp.eq.s32.totalorder %s26, 0
      %p85 = por %p83, %p84
      %p86 = scmp.ne.s32.totalorder %s72, %s73
      %p87 = scmp.eq.s32.totalorder %s27, 3
      %p88 = por %p86, %p87
      %p90 = scmp.ne.s32.totalorder %s73, %s89
      %p91 = scmp.eq.s32.totalorder %s27, 0
      %p92 = por %p90, %p91
      %s93 = ssub.s32 %s29, %s36
      %p94 = scmp.eq.s32.totalorder %s93, 0
      %s96 = sadd.s32 %s95, 1
      %s97 = scalar_select %p94, %s95, %s96
      %p100 = pneg %p94
      %p101 = scmp.eq.s32.totalorder %s21, 3
      %p102 = por %p100, %p101
      %p103 = scmp.ne.s32.totalorder %s95, %s98
      %p104 = scmp.eq.s32.totalorder %s21, 0
      %p105 = por %p103, %p104
      %p106 = scmp.ne.s32.totalorder %s95, %s98
      %p107 = scmp.eq.s32.totalorder %s26, 3
      %p108 = por %p106, %p107
      %p109 = scmp.ne.s32.totalorder %s98, %s99
      %p110 = scmp.eq.s32.totalorder %s26, 0
      %p111 = por %p109, %p110
      %p112 = scmp.ne.s32.totalorder %s98, %s99
      %p113 = scmp.eq.s32.totalorder %s27, 3
      %p114 = por %p112, %p113
      %p116 = scmp.ne.s32.totalorder %s99, %s115
      %p117 = scmp.eq.s32.totalorder %s27, 0
      %p118 = por %p116, %p117
      %s119 = ssub.s32 %s28, %s40
      %p120 = scmp.eq.s32.totalorder %s119, 0
      %s122 = sadd.s32 %s121, 1
      %s123 = scalar_select %p120, %s121, %s122
      %p126 = pneg %p120
      %p127 = scmp.eq.s32.totalorder %s21, 3
      %p128 = por %p126, %p127
      %p129 = scmp.ne.s32.totalorder %s121, %s124
      %p130 = scmp.eq.s32.totalorder %s21, 0
      %p131 = por %p129, %p130
      %p132 = scmp.ne.s32.totalorder %s121, %s124
      %p133 = scmp.eq.s32.totalorder %s26, 3
      %p134 = por %p132, %p133
      %p135 = scmp.ne.s32.totalorder %s124, %s125
      %p136 = scmp.eq.s32.totalorder %s26, 0
      %p137 = por %p135, %p136
      %p138 = scmp.ne.s32.totalorder %s124, %s125
      %p139 = scmp.eq.s32.totalorder %s27, 3
      %p140 = por %p138, %p139
      %p142 = scmp.ne.s32.totalorder %s125, %s141
      %p143 = scmp.eq.s32.totalorder %s27, 0
      %p144 = por %p142, %p143
      %s145 = ssub.s32 %s28, %s40
      %p146 = scmp.eq.s32.totalorder %s145, 0
      %s148 = sadd.s32 %s147, 1
      %s149 = scalar_select %p146, %s147, %s148
      %p152 = pneg %p146
      %p153 = scmp.eq.s32.totalorder %s21, 3
      %p154 = por %p152, %p153
      %p155 = scmp.ne.s32.totalorder %s147, %s150
      %p156 = scmp.eq.s32.totalorder %s21, 0
      %p157 = por %p155, %p156
      %p158 = scmp.ne.s32.totalorder %s147, %s150
      %p159 = scmp.eq.s32.totalorder %s26, 3
      %p160 = por %p158, %p159
      %p161 = scmp.ne.s32.totalorder %s150, %s151
      %p162 = scmp.eq.s32.totalorder %s26, 0
      %p163 = por %p161, %p162
      %p164 = scmp.ne.s32.totalorder %s150, %s151
      %p165 = scmp.eq.s32.totalorder %s27, 3
      %p166 = por %p164, %p165
      %p168 = scmp.ne.s32.totalorder %s151, %s167
      %p169 = scmp.eq.s32.totalorder %s27, 0
      %p170 = por %p168, %p169
      %s171 = ssub.s32 %s28, %s40
      %p172 = scmp.eq.s32.totalorder %s171, 0
      %s174 = sadd.s32 %s173, 1
      %s175 = scalar_select %p172, %s173, %s174
      %p178 = pneg %p172
      %p179 = scmp.eq.s32.totalorder %s21, 3
      %p180 = por %p178, %p179
      %p181 = scmp.ne.s32.totalorder %s173, %s176
      %p182 = scmp.eq.s32.totalorder %s21, 0
      %p183 = por %p181, %p182
      %p184 = scmp.ne.s32.totalorder %s173, %s176
      %p185 = scmp.eq.s32.totalorder %s26, 3
      %p186 = por %p184, %p185
      %p187 = scmp.ne.s32.totalorder %s176, %s177
      %p188 = scmp.eq.s32.totalorder %s26, 0
      %p189 = por %p187, %p188
      %p190 = scmp.ne.s32.totalorder %s176, %s177
      %p191 = scmp.eq.s32.totalorder %s27, 3
      %p192 = por %p190, %p191
      %p194 = scmp.ne.s32.totalorder %s177, %s193
      %p195 = scmp.eq.s32.totalorder %s27, 0
      %p196 = por %p194, %p195
      %p197 = scmp.le.s32.totalorder 1, %s21
      %p198 = scmp.lt.s32.totalorder %s21, 5
      %p199 = pnand %p197, %p198
      %p200 = pneg %p199
      // Predicated region
      $region9: #{tpu_custom_call.1} parent=5 // pred_check
        _
      $region10: #{tpu_custom_call.1} parent=5 // pred_check_branch
        %202 = sbr.rel (%p199) target = $region12
      $region11: #{tpu_custom_call.1} parent=5 // pred_region
        %s203 = ssub.s32 %s21, 1
      $region12: #{tpu_custom_call.1} parent=5 // pred_fallthru
        _
      %p204 = scmp.lt.s32.totalorder %s21, 4
      // Predicated region
      $region13: #{tpu_custom_call.1} parent=5 // pred_check
        %p205 = pneg %p204
      $region14: #{tpu_custom_call.1} parent=5 // pred_check_branch
        %207 = sbr.rel (%p205) target = $region16
      $region15: #{tpu_custom_call.1} parent=5 // pred_region
        // Predicated region
        $region17: #{tpu_custom_call.1} parent=15 // pred_check
          %p208 = pneg %p53
        $region18: #{tpu_custom_call.1} parent=15 // pred_check_branch
          %210 = sbr.rel (%p208) target = $region20
        $region19: #{tpu_custom_call.1} parent=15 // pred_region
          %s211 = sand.u32 %s43, 1
          %s212 = scalar_lea.sflag [#allocation6], %s211
          %s213 = sand.u32 %s43, 1
          %s214 = smul.addr %s213, 16
          %s215 = scalar_lea.vmem [#allocation5], %s214
          %217 = vsyncadd %s212, 0
          %s218 = smul.addr %s28, 2
          %s219 = smul.addr %s218, 8
          %s220 = scalar_lea.hbm %s0, %s219
          %s222 = sshll.u32 %s220, 4
          %s223 = int_to_ptr.hbm [resolvable:$true] %s222
          %s224 = sshll.u32 %s215, 4
          %s225 = int_to_ptr.vmem [resolvable:$true] %s224
          %227 = dma.hbm_to_vmem [thread:$0]  %s223, 256, %s225, %s212
        $region20: #{tpu_custom_call.1} parent=15 // pred_fallthru
          _
        // Predicated region
        $region21: #{tpu_custom_call.1} parent=15 // pred_check
          %p228 = pneg %p79
        $region22: #{tpu_custom_call.1} parent=15 // pred_check_branch
          %230 = sbr.rel (%p228) target = $region24
        $region23: #{tpu_custom_call.1} parent=15 // pred_region
          %s231 = sand.u32 %s21, 1
          %s232 = scalar_lea.sflag [#allocation8], %s231
          %s233 = sand.u32 %s69, 1
          %s234 = smul.addr %s233, 16
          %s235 = scalar_lea.vmem [#allocation7], %s234
          %237 = vsyncadd %s232, 0
          %s238 = smul.addr %s28, 2
          %s239 = smul.addr %s238, 8
          %s240 = scalar_lea.hbm %s1, %s239
          %s242 = sshll.u32 %s240, 4
          %s243 = int_to_ptr.hbm [resolvable:$true] %s242
          %s244 = sshll.u32 %s235, 4
          %s245 = int_to_ptr.vmem [resolvable:$true] %s244
          %247 = dma.hbm_to_vmem [thread:$0]  %s243, 256, %s245, %s232
        $region24: #{tpu_custom_call.1} parent=15 // pred_fallthru
          _
        // Predicated region
        $region25: #{tpu_custom_call.1} parent=15 // pred_check
          %p248 = pneg %p105
        $region26: #{tpu_custom_call.1} parent=15 // pred_check_branch
          %250 = sbr.rel (%p248) target = $region28
        $region27: #{tpu_custom_call.1} parent=15 // pred_region
          %s251 = sand.u32 %s21, 1
          %s252 = scalar_lea.sflag [#allocation8], %s251
          %s253 = sand.u32 %s95, 1
          %s254 = smul.addr %s253, 128
          %s255 = scalar_lea.vmem [#allocation9], %s254
          %257 = vsyncadd %s252, 0
          %s258 = smul.addr %s29, 4
          %s259 = scalar_lea.hbm %s2, %s258
          %s260 = sshll.u32 %s259, 4
          %s261 = int_to_ptr.hbm [resolvable:$true] %s260
          %s262 = sshll.u32 %s255, 4
          %s263 = int_to_ptr.vmem [resolvable:$true] %s262
          %268 = dma.hbm_to_vmem [thread:$0]  %s261, 2048, %s263, %s252, 128, 64, 4
        $region28: #{tpu_custom_call.1} parent=15 // pred_fallthru
          _
        // Predicated region
        $region29: #{tpu_custom_call.1} parent=15 // pred_check
          %p269 = pneg %p131
        $region30: #{tpu_custom_call.1} parent=15 // pred_check_branch
          %271 = sbr.rel (%p269) target = $region32
        $region31: #{tpu_custom_call.1} parent=15 // pred_region
          %s272 = sand.u32 %s121, 1
          %s273 = scalar_lea.sflag [#allocation11], %s272
          %s274 = sand.u32 %s121, 1
          %s275 = smul.addr %s274, 16
          %s276 = scalar_lea.vmem [#allocation10], %s275
          %278 = vsyncadd %s273, 0
          %s279 = smul.addr %s28, 2
          %s280 = smul.addr %s279, 8
          %s281 = scalar_lea.hbm %s3, %s280
          %s283 = sshll.u32 %s281, 4
          %s284 = int_to_ptr.hbm [resolvable:$true] %s283
          %s285 = sshll.u32 %s276, 4
          %s286 = int_to_ptr.vmem [resolvable:$true] %s285
          %288 = dma.hbm_to_vmem [thread:$0]  %s284, 256, %s286, %s273
        $region32: #{tpu_custom_call.1} parent=15 // pred_fallthru
          _
      $region16: #{tpu_custom_call.1} parent=5 // pred_fallthru
        _
      %p289 = scmp.le.s32.totalorder 1, %s21
      %p290 = scmp.lt.s32.totalorder %s21, 5
      %p291 = pnand %p289, %p290
      %p292 = pneg %p291
      // Predicated region
      $region33: #{tpu_custom_call.1} parent=5 // pred_check
        _
      $region34: #{tpu_custom_call.1} parent=5 // pred_check_branch
        %294 = sbr.rel (%p291) target = $region36
      $region35: #{tpu_custom_call.1} parent=5 // pred_region
        %s295 = ssub.s32 %s21, 1
        %s296 = sand.u32 %s46, 1
        %s297 = scalar_lea.sflag [#allocation6], %s296
        %s298 = sand.u32 %s46, 1
        %s299 = smul.addr %s298, 16
        %s300 = scalar_lea.vmem [#allocation5], %s299
        // Predicated region
        $region37: #{tpu_custom_call.1} parent=35 // pred_check
          %p301 = pneg %p59
        $region38: #{tpu_custom_call.1} parent=35 // pred_check_branch
          %303 = sbr.rel (%p301) target = $region40
        $region39: #{tpu_custom_call.1} parent=35 // pred_region
          %305 = dma.done %s297, 256
        $region40: #{tpu_custom_call.1} parent=35 // pred_fallthru
          _
        %s306 = sand.u32 %s26, 1
        %s307 = scalar_lea.sflag [#allocation8], %s306
        %s308 = sand.u32 %s72, 1
        %s309 = smul.addr %s308, 16
        %s310 = scalar_lea.vmem [#allocation7], %s309
        // Predicated region
        $region41: #{tpu_custom_call.1} parent=35 // pred_check
          %p311 = pneg %p85
        $region42: #{tpu_custom_call.1} parent=35 // pred_check_branch
          %313 = sbr.rel (%p311) target = $region44
        $region43: #{tpu_custom_call.1} parent=35 // pred_region
          %315 = dma.done %s307, 256
        $region44: #{tpu_custom_call.1} parent=35 // pred_fallthru
          _
        %s316 = sand.u32 %s26, 1
        %s317 = scalar_lea.sflag [#allocation8], %s316
        %s318 = sand.u32 %s98, 1
        %s319 = smul.addr %s318, 128
        %s320 = scalar_lea.vmem [#allocation9], %s319
        // Predicated region
        $region45: #{tpu_custom_call.1} parent=35 // pred_check
          %p321 = pneg %p111
        $region46: #{tpu_custom_call.1} parent=35 // pred_check_branch
          %323 = sbr.rel (%p321) target = $region48
        $region47: #{tpu_custom_call.1} parent=35 // pred_region
          %325 = dma.done %s317, 2048
        $region48: #{tpu_custom_call.1} parent=35 // pred_fallthru
          _
        %s326 = sand.u32 %s124, 1
        %s327 = scalar_lea.sflag [#allocation11], %s326
        %s328 = sand.u32 %s124, 1
        %s329 = smul.addr %s328, 16
        %s330 = scalar_lea.vmem [#allocation10], %s329
        // Predicated region
        $region49: #{tpu_custom_call.1} parent=35 // pred_check
          %p331 = pneg %p137
        $region50: #{tpu_custom_call.1} parent=35 // pred_check_branch
          %333 = sbr.rel (%p331) target = $region52
        $region51: #{tpu_custom_call.1} parent=35 // pred_region
          %335 = dma.done %s327, 256
        $region52: #{tpu_custom_call.1} parent=35 // pred_fallthru
          _
        %s336 = sand.u32 %s46, 1
        %s337 = scalar_lea.sflag [#allocation6], %s336
        %s338 = sand.u32 %s46, 1
        %s339 = smul.addr %s338, 16
        %s340 = scalar_lea.vmem [#allocation5], %s339
        %p341 = pneg %p59
        %p342 = pneg %p56
        %s343 = sand.u32 %s26, 1
        %s344 = scalar_lea.sflag [#allocation8], %s343
        %s345 = sand.u32 %s72, 1
        %s346 = smul.addr %s345, 16
        %s347 = scalar_lea.vmem [#allocation7], %s346
        %p348 = pneg %p85
        %p349 = pneg %p82
        %s350 = sand.u32 %s26, 1
        %s351 = scalar_lea.sflag [#allocation8], %s350
        %s352 = sand.u32 %s98, 1
        %s353 = smul.addr %s352, 128
        %s354 = scalar_lea.vmem [#allocation9], %s353
        %p355 = pneg %p111
        %p356 = pneg %p108
        %s357 = sand.u32 %s124, 1
        %s358 = scalar_lea.sflag [#allocation11], %s357
        %s359 = sand.u32 %s124, 1
        %s360 = smul.addr %s359, 16
        %s361 = scalar_lea.vmem [#allocation10], %s360
        %p362 = pneg %p137
        %p363 = pneg %p134
        %p364 = pneg %p163
        %p365 = pneg %p160
        %p366 = scmp.lt.s32.totalorder %s30, 1
        %s367 = scalar_select %p366, %s30, 1
        %s368 = smul.addr %s367, 8
        %s369 = scalar_lea.vmem %s4, %s368
        %p370 = pneg %p189
        %p371 = pneg %p186
        %p372 = scmp.lt.s32.totalorder %s30, 1
        %s373 = scalar_select %p372, %s30, 1
        %s374 = smul.addr %s373, 8
        %s375 = scalar_lea.vmem %s5, %s374
        %p376 = scmp.lt.s32.totalorder %s30, 1
        %s377 = scalar_select %p376, %s30, 1
        %s378 = smul.addr %s377, 8
        %s379 = scalar_lea.vmem %s4, %s378
        %p380 = scmp.lt.s32.totalorder %s30, 1
        %s381 = scalar_select %p380, %s30, 1
        %s382 = smul.addr %s381, 8
        %s383 = scalar_lea.vmem %s5, %s382
        %p384 = scmp.eq.s32.totalorder %s31, 0
        // Predicated region
        $region53: #{tpu_custom_call.1} parent=35 // pred_check
          %p385 = pneg %p384
        $region54: #{tpu_custom_call.1} parent=35 // pred_check_branch
          %387 = sbr.rel (%p385) target = $region56
        $region55: #{tpu_custom_call.1} parent=35 // pred_region
          %v388 = vld [vmem:[%s300] sm:$0xff]
          %v389 = vld [vmem:[%s300 + $0x8] sm:$0xff]
          %v390 = vld [vmem:[%s310] sm:$0xff]
          %v391 = vld [vmem:[%s310 + $0x8] sm:$0xff]
          %v392 = vsub.f32 %v388, %v390
          %v393 = vsub.f32 %v389, %v391
          %v394 = vmul.f32 %v392, %v392
          %v395 = vmul.f32 %v393, %v393
          %v396 = vadd.f32 %v394, %v395
          %397 = vadd.xlane.f32.xlu0 %v396
          %v398 = vpop.xlane.xlu0 %397
          %vm399 = vcmask 7168
          %400 = vst.msk [vmem:[%s379] sm:$0xff] %vm399, %v398
          %v401 = vpack.c.bf16 %v389, %v388
          %402 = vst [vmem:[#allocation4] sm:$0xff] %v401
          %403 = vst.msk [vmem:[#allocation2] sm:$0xff] %vm399, -inf
          %404 = vst.msk [vmem:[#allocation3] sm:$0xff] %vm399, 0.0
        $region56: #{tpu_custom_call.1} parent=35 // pred_fallthru
          _
        %v405 = vld [vmem:[#allocation4] sm:$0xff]
        %v406 = vld [vmem:[%s320] sm:$0xf]
        %v407 = vld [vmem:[%s320 + $0x4] sm:$0xf]
        %v408 = vld [vmem:[%s320 + $0x8] sm:$0xf]
        %v409 = vld [vmem:[%s320 + $0xc] sm:$0xf]
        %v410 = vld [vmem:[%s320 + $0x10] sm:$0xf]
        %v411 = vld [vmem:[%s320 + $0x14] sm:$0xf]
        %v412 = vld [vmem:[%s320 + $0x18] sm:$0xf]
        %v413 = vld [vmem:[%s320 + $0x1c] sm:$0xf]
        %v414 = vld [vmem:[%s320 + $0x20] sm:$0xf]
        %v415 = vld [vmem:[%s320 + $0x24] sm:$0xf]
        %v416 = vld [vmem:[%s320 + $0x28] sm:$0xf]
        %v417 = vld [vmem:[%s320 + $0x2c] sm:$0xf]
        %v418 = vld [vmem:[%s320 + $0x30] sm:$0xf]
        %v419 = vld [vmem:[%s320 + $0x34] sm:$0xf]
        %v420 = vld [vmem:[%s320 + $0x38] sm:$0xf]
        %v421 = vld [vmem:[%s320 + $0x3c] sm:$0xf]
        %v422 = vld [vmem:[%s320 + $0x40] sm:$0xf]
        %v423 = vld [vmem:[%s320 + $0x44] sm:$0xf]
        %v424 = vld [vmem:[%s320 + $0x48] sm:$0xf]
        %v425 = vld [vmem:[%s320 + $0x4c] sm:$0xf]
        %v426 = vld [vmem:[%s320 + $0x50] sm:$0xf]
        %v427 = vld [vmem:[%s320 + $0x54] sm:$0xf]
        %v428 = vld [vmem:[%s320 + $0x58] sm:$0xf]
        %v429 = vld [vmem:[%s320 + $0x5c] sm:$0xf]
        %v430 = vld [vmem:[%s320 + $0x60] sm:$0xf]
        %v431 = vld [vmem:[%s320 + $0x64] sm:$0xf]
        %v432 = vld [vmem:[%s320 + $0x68] sm:$0xf]
        %v433 = vld [vmem:[%s320 + $0x6c] sm:$0xf]
        %v434 = vld [vmem:[%s320 + $0x70] sm:$0xf]
        %v435 = vld [vmem:[%s320 + $0x74] sm:$0xf]
        %v436 = vld [vmem:[%s320 + $0x78] sm:$0xf]
        %v437 = vld [vmem:[%s320 + $0x7c] sm:$0xf]
        %v439 = vunpack.c.l.b16 %v405
        %v440 = vunpack.c.h.b16 %v405
        %v441 = vpack.c.b16 %v439, %v439
        %v442 = vpack.c.b16 %v440, %v440
        %v477 = vunpack.c.l.b16 %v406
        %v478 = vunpack.c.l.b16 %v407
        %v479 = vunpack.c.l.b16 %v408
        %v480 = vunpack.c.l.b16 %v409
        %v481 = vunpack.c.l.b16 %v410
        %v482 = vunpack.c.l.b16 %v411
        %v483 = vunpack.c.l.b16 %v412
        %v484 = vunpack.c.l.b16 %v413
        %v485 = vunpack.c.l.b16 %v414
        %v486 = vunpack.c.l.b16 %v415
        %v487 = vunpack.c.l.b16 %v416
        %v488 = vunpack.c.l.b16 %v417
        %v489 = vunpack.c.l.b16 %v418
        %v490 = vunpack.c.l.b16 %v419
        %v491 = vunpack.c.l.b16 %v420
        %v492 = vunpack.c.l.b16 %v421
        %v493 = vunpack.c.l.b16 %v422
        %v494 = vunpack.c.l.b16 %v423
        %v495 = vunpack.c.l.b16 %v424
        %v496 = vunpack.c.l.b16 %v425
        %v497 = vunpack.c.l.b16 %v426
        %v498 = vunpack.c.l.b16 %v427
        %v499 = vunpack.c.l.b16 %v428
        %v500 = vunpack.c.l.b16 %v429
        %v501 = vunpack.c.l.b16 %v430
        %v502 = vunpack.c.l.b16 %v431
        %v503 = vunpack.c.l.b16 %v432
        %v504 = vunpack.c.l.b16 %v433
        %v505 = vunpack.c.l.b16 %v434
        %v506 = vunpack.c.l.b16 %v435
        %v507 = vunpack.c.l.b16 %v436
        %v508 = vunpack.c.l.b16 %v437
        %v509 = vpack.c.b16 %v478, %v477
        %v510 = vpack.c.b16 %v480, %v479
        %v511 = vpack.c.b16 %v482, %v481
        %v512 = vpack.c.b16 %v484, %v483
        %v513 = vpack.c.b16 %v486, %v485
        %v514 = vpack.c.b16 %v488, %v487
        %v515 = vpack.c.b16 %v490, %v489
        %v516 = vpack.c.b16 %v492, %v491
        %v517 = vpack.c.b16 %v494, %v493
        %v518 = vpack.c.b16 %v496, %v495
        %v519 = vpack.c.b16 %v498, %v497
        %v520 = vpack.c.b16 %v500, %v499
        %v521 = vpack.c.b16 %v502, %v501
        %v522 = vpack.c.b16 %v504, %v503
        %v523 = vpack.c.b16 %v506, %v505
        %v524 = vpack.c.b16 %v508, %v507
        %541 = vmatpush.bf16.msra.mxu0 %v516
        %542 = vmatpush.bf16.msra.mxu0 %v515
        %543 = vmatpush.bf16.msra.mxu0 %v514
        %544 = vmatpush.bf16.msra.mxu0 %v513
        %545 = vmatpush.bf16.msra.mxu0 %v512
        %546 = vmatpush.bf16.msra.mxu0 %v511
        %547 = vmatpush.bf16.msra.mxu0 %v510
        %548 = vmatpush.bf16.msra.mxu0 %v509
        %549 = vmatmul.bf16.gmra.mxu0 %v441
        %v550 = vpop.f32.mrf.mxu0
        %v551 = vadd.f32 0.0, %v550
        %v552 = vpop.f32.mrf.mxu0
        %553 = vdwg.mxu0
        %554 = vmatpush.bf16.msra.mxu0 %v524
        %555 = vmatpush.bf16.msra.mxu0 %v523
        %556 = vmatpush.bf16.msra.mxu0 %v522
        %557 = vmatpush.bf16.msra.mxu0 %v521
        %558 = vmatpush.bf16.msra.mxu0 %v520
        %559 = vmatpush.bf16.msra.mxu0 %v519
        %560 = vmatpush.bf16.msra.mxu0 %v518
        %561 = vmatpush.bf16.msra.mxu0 %v517
        %562 = vmatmul.bf16.gmra.mxu0 %v442
        %v563 = vpop.f32.mrf.mxu0
        %v564 = vadd.f32 %v551, %v563
        %v565 = vpop.f32.mrf.mxu0
        %566 = vdwg.mxu0
        %v567 = vlaneseq
        %v568 = vand.u32 %v567, 127
        %s569 = smul.u32 %s31, 128
        %s570 = ssub.s32 200, %s569
        %v571 = vstv %s570
        %vm572 = vcmp.lt.s32.totalorder %v568, %v571
        %v573 = vsel %vm572, %v564, -inf
        %v574 = vld [vmem:[#allocation2] sm:$0xff]
        %575 = vmax.xlane.f32.xlu0 %v573
        %v576 = vpop.xlane.xlu0 %575
        %v577 = vmax.f32 %v574, %v576
        %v578 = vsub.f32 %v574, %v577
        %v579 = vmul.f32 %v578, 1.442695
        %v580 = vpow.pop %v579
        %v581 = vld [vmem:[#allocation3] sm:$0xff]
        %v582 = vmul.f32 %v580, %v581
        %584 = vset.pattern.permute.xlu0 0
        %585 = vperm.xlu0 %584, %v577
        %v586 = vpop.permute.xlu0 %585
        %v588 = vsub.f32 %v573, %v586
        %v589 = vmul.f32 %v588, 1.442695
        %v590 = vpow.pop %v589
        %591 = vadd.xlane.f32.xlu0 %v590
        %v592 = vpop.xlane.xlu0 %591
        %v593 = vadd.f32 %v582, %v592
        %vm594 = vcmask 7168
        %595 = vst.msk [vmem:[#allocation3] sm:$0xff] %vm594, %v593
        %596 = vst.msk [vmem:[#allocation2] sm:$0xff] %vm594, %v577
        %p597 = scmp.eq.s32.totalorder %s31, 1
        // Predicated region
        $region57: #{tpu_custom_call.1} parent=35 // pred_check
          %p598 = pneg %p597
        $region58: #{tpu_custom_call.1} parent=35 // pred_check_branch
          %600 = sbr.rel (%p598) target = $region60
        $region59: #{tpu_custom_call.1} parent=35 // pred_region
          %v601 = vld [vmem:[#allocation2] sm:$0xff]
          %v602 = vld [vmem:[#allocation3] sm:$0xff]
          %v603 = vlog2.pop %v602
          %v604 = vmul.f32 %v603, 0.6931472
          %v605 = vadd.f32 %v601, %v604
          %v606 = vld [vmem:[%s300] sm:$0xff]
          %v607 = vld [vmem:[%s300 + $0x8] sm:$0xff]
          %v608 = vld [vmem:[%s330] sm:$0xff]
          %v609 = vld [vmem:[%s330 + $0x8] sm:$0xff]
          %v610 = vmul.f32 %v606, %v608
          %v611 = vmul.f32 %v607, %v609
          %v612 = vadd.f32 %v610, %v611
          %613 = vadd.xlane.f32.xlu0 %v612
          %v614 = vpop.xlane.xlu0 %613
          %v615 = vsub.f32 %v605, %v614
          %616 = vst.msk [vmem:[%s383] sm:$0xff] %vm594, %v615
        $region60: #{tpu_custom_call.1} parent=35 // pred_fallthru
          _
        %p617 = scmp.lt.s32.totalorder %s30, 1
        %s618 = scalar_select %p617, %s30, 1
        %s619 = smul.addr %s618, 8
        %s620 = scalar_lea.vmem %s4, %s619
        %p621 = scmp.lt.s32.totalorder %s30, 1
        %s622 = scalar_select %p621, %s30, 1
        %s623 = smul.addr %s622, 8
        %s624 = scalar_lea.vmem %s5, %s623
        // Predicated region
        $region61: #{tpu_custom_call.1} parent=35 // pred_check
          %p625 = pneg %p160
        $region62: #{tpu_custom_call.1} parent=35 // pred_check_branch
          %627 = sbr.rel (%p625) target = $region64
        $region63: #{tpu_custom_call.1} parent=35 // pred_region
          _
        $region64: #{tpu_custom_call.1} parent=35 // pred_fallthru
          _
        // Predicated region
        $region65: #{tpu_custom_call.1} parent=35 // pred_check
          %p628 = pneg %p186
        $region66: #{tpu_custom_call.1} parent=35 // pred_check_branch
          %630 = sbr.rel (%p628) target = $region68
        $region67: #{tpu_custom_call.1} parent=35 // pred_region
          _
        $region68: #{tpu_custom_call.1} parent=35 // pred_fallthru
          _
      $region36: #{tpu_custom_call.1} parent=5 // pred_fallthru
        _
      %p631 = scmp.le.s32.totalorder 2, %s21
      // Predicated region
      $region69: #{tpu_custom_call.1} parent=5 // pred_check
        %p632 = pneg %p631
      $region70: #{tpu_custom_call.1} parent=5 // pred_check_branch
        %634 = sbr.rel (%p632) target = $region72
      $region71: #{tpu_custom_call.1} parent=5 // pred_region
        %s635 = ssub.s32 %s21, 2
        // Predicated region
        $region73: #{tpu_custom_call.1} parent=71 // pred_check
          %p636 = pneg %p166
        $region74: #{tpu_custom_call.1} parent=71 // pred_check_branch
          %638 = sbr.rel (%p636) target = $region76
        $region75: #{tpu_custom_call.1} parent=71 // pred_region
          %p639 = scmp.lt.s32.totalorder %s32, 1
          %s640 = scalar_select %p639, %s32, 1
          %s641 = smul.addr %s640, 8
          %s642 = scalar_lea.vmem %s4, %s641
        $region76: #{tpu_custom_call.1} parent=71 // pred_fallthru
          _
        // Predicated region
        $region77: #{tpu_custom_call.1} parent=71 // pred_check
          %p643 = pneg %p192
        $region78: #{tpu_custom_call.1} parent=71 // pred_check_branch
          %645 = sbr.rel (%p643) target = $region80
        $region79: #{tpu_custom_call.1} parent=71 // pred_region
          %p646 = scmp.lt.s32.totalorder %s32, 1
          %s647 = scalar_select %p646, %s32, 1
          %s648 = smul.addr %s647, 8
          %s649 = scalar_lea.vmem %s5, %s648
        $region80: #{tpu_custom_call.1} parent=71 // pred_fallthru
          _
      $region72: #{tpu_custom_call.1} parent=5 // pred_fallthru
        _
    $region6: #{tpu_custom_call.1} parent=1 // loop_footer
      %s25 = sadd.s32 1, %s21
    $region7: #{tpu_custom_call.1} parent=1 // loop_footer_branch
      %20 = sbr.rel target = $region3
    $region8: #{tpu_custom_call.1} parent=1 // loop_exit
      _
    %650 = vsyncpa [#allocation6], 1
    %s651 = scalar_lea.sflag [#allocation6], 1
    %652 = vsyncpa %s651, 1
    %653 = vsyncpa [#allocation8], 1
    %s654 = scalar_lea.sflag [#allocation8], 1
    %655 = vsyncpa %s654, 1
    %656 = vsyncpa [#allocation11], 1
    %s657 = scalar_lea.sflag [#allocation11], 1
    %658 = vsyncpa %s657, 1

</llo_original>
